<compile_context>
chip_gen: v7x
topology: tpu7x:2x2x1
jax: 0.10.0
libtpu: 0.0.40
codegen_flags: <defaults>
</compile_context>

<pallas_src>
import functools

import jax
import jax.numpy as jnp
from jax.experimental import pallas as pl
from jax.experimental.pallas import tpu as pltpu


def _round_up(n: int, m: int) -> int:
    return ((n + m - 1) // m) * m


def dqn_mlp_kernel(x_ref, w1_ref, b1_ref, w2_ref, b2_ref, w3_ref, b3_ref, o_ref):
    # One batch tile per grid step. All three matmuls run on the MXU with bf16
    # operands / f32 accumulation; bias add + ReLU stay in f32 on the VPU.
    x = x_ref[...]                                                        # (TM, F_in) bf16
    h1 = jnp.dot(x, w1_ref[...], preferred_element_type=jnp.float32) + b1_ref[...]
    h1 = jnp.maximum(h1, 0.0).astype(jnp.bfloat16)
    h2 = jnp.dot(h1, w2_ref[...], preferred_element_type=jnp.float32) + b2_ref[...]
    h2 = jnp.maximum(h2, 0.0).astype(jnp.bfloat16)
    out = jnp.dot(h2, w3_ref[...], preferred_element_type=jnp.float32) + b3_ref[...]
    o_ref[...] = out.astype(o_ref.dtype)                                  # (TM, F_out_p) f32, lane-dense


def prepare_params(params):
    """One-time parameter prep (hoisted out of the forward path).

    Casts weights to bf16 and pads only the narrow OUTPUT feature dim of the
    last layer to 128 lanes so the kernel's output store stays unmasked.
    Returns (prepared_params, n_out) where n_out is the real output width.
    """
    w1, b1, w2, b2, w3, b3 = params
    F_in, H1 = w1.shape
    H2 = w2.shape[1]
    F_out = w3.shape[1]
    F_out_p = _round_up(F_out, 128)

    w1_p = w1.astype(jnp.bfloat16)                                        # (F_in, H1), F_in=16 real
    w2_p = w2.astype(jnp.bfloat16)                                        # (H1, H2)
    w3_p = jnp.zeros((H2, F_out_p), jnp.bfloat16).at[:, :F_out].set(
        w3.astype(jnp.bfloat16))
    b1_p = b1.reshape(1, H1).astype(jnp.float32)
    b2_p = b2.reshape(1, H2).astype(jnp.float32)
    b3_p = jnp.zeros((1, F_out_p), jnp.float32).at[:, :F_out].set(
        b3.reshape(1, F_out).astype(jnp.float32))
    prepared = (w1_p, b1_p, w2_p, b2_p, w3_p, b3_p)
    return prepared, F_out


def _choose_tile_m(B: int) -> int:
    """Adaptive batch tile size.

    - Tiny (inference) batches: single tile, minimal row padding.
    - Training batches: 256/512-row tiles (full MXU M-dim on v6e/v7x) while
      keeping >= 2 grid steps so v7x's two TensorCores both get work.
    """
    if B <= 256:
        return _round_up(max(B, 8), 16)
    for tile in (512, 256):
        if _round_up(B, tile) // tile >= 2:
            return tile
    return 256


@functools.partial(jax.jit, static_argnames=("n_out", "tile_m"))
def _dqn_forward_impl(x2d, prepared_params, *, n_out, tile_m):
    w1_p, b1_p, w2_p, b2_p, w3_p, b3_p = prepared_params
    B, F_in = x2d.shape
    H1 = w1_p.shape[1]
    H2 = w2_p.shape[1]
    F_out_p = w3_p.shape[1]

    B_p = _round_up(max(B, tile_m), tile_m)
    # Row-pad only; feature dim stays at its real (narrow) width.
    x_p = jnp.pad(x2d.astype(jnp.bfloat16), ((0, B_p - B), (0, 0)))

    grid = (B_p // tile_m,)

    # VMEM budget from actual buffer sizes (double-buffered activations/out,
    # single-buffered resident weights, f32+bf16 intermediates), 2x headroom.
    resident = (F_in * H1 + H1 * H2 + H2 * F_out_p) * 2 + (H1 + H2 + F_out_p) * 4
    per_tile = (2 * tile_m * F_in * 2
                + 2 * tile_m * F_out_p * 4
                + tile_m * (H1 + H2) * 6)
    vmem_limit = int(min(32 * 1024 * 1024,
                         max(4 * 1024 * 1024, 2 * (resident + per_tile))))

    flops = 2 * B_p * (F_in * H1 + H1 * H2 + H2 * F_out_p)
    bytes_accessed = B_p * F_in * 2 + resident + B_p * F_out_p * 4

    const = lambda i: (0, 0)

    out_p = pl.pallas_call(
        dqn_mlp_kernel,
        out_shape=jax.ShapeDtypeStruct((B_p, F_out_p), jnp.float32),
        grid_spec=pltpu.PrefetchScalarGridSpec(
            num_scalar_prefetch=0,
            grid=grid,
            in_specs=[
                # Activations: tiled over batch, auto double-buffered.
                pl.BlockSpec((tile_m, F_in), lambda i: (i, 0)),
                # Weights / biases: constant index_map, single-buffered
                # (resident in VMEM for the whole grid, no redundant DMAs).
                pl.BlockSpec((F_in, H1), const, pipeline_mode=pl.Buffered(1)),
                pl.BlockSpec((1, H1), const, pipeline_mode=pl.Buffered(1)),
                pl.BlockSpec((H1, H2), const, pipeline_mode=pl.Buffered(1)),
                pl.BlockSpec((1, H2), const, pipeline_mode=pl.Buffered(1)),
                pl.BlockSpec((H2, F_out_p), const, pipeline_mode=pl.Buffered(1)),
                pl.BlockSpec((1, F_out_p), const, pipeline_mode=pl.Buffered(1)),
            ],
            out_specs=pl.BlockSpec((tile_m, F_out_p), lambda i: (i, 0)),
        ),
        compiler_params=pltpu.CompilerParams(
            # Independent batch tiles -> megacore / 2-TC split on v7x.
            dimension_semantics=("parallel",),
            vmem_limit_bytes=vmem_limit,
        ),
        cost_estimate=pl.CostEstimate(
            flops=int(flops), transcendentals=0, bytes_accessed=int(bytes_accessed)),
    )(x_p, w1_p, b1_p, w2_p, b2_p, w3_p, b3_p)

    # Strip batch padding and the zero-padded output columns.
    return out_p[:B, :n_out]


def dqn_forward(x, prepared_params, n_out):
    """x: (B, input_size, input_size) or (B, F). Returns (B, n_out) float32."""
    B = x.shape[0]
    x2d = x.reshape(B, -1)
    tile_m = _choose_tile_m(B)
    return _dqn_forward_impl(x2d, prepared_params, n_out=n_out, tile_m=tile_m)


def init_params(input_size, key):
    """Deterministic synthetic parameter init matching DQN(__init__) shapes.

    Weights stored (in_features, out_features): x @ W + b, equivalent to
    PyTorch's x @ W.T + b with W of shape (out, in).
    """
    f = input_size * input_size
    dims = [(f, 256), (256, 128), (128, f)]
    params = []
    keys = jax.random.split(key, 2 * len(dims))
    for i, (d_in, d_out) in enumerate(dims):
        scale = 1.0 / jnp.sqrt(jnp.float32(d_in))
        w = jax.random.uniform(keys[2 * i], (d_in, d_out), jnp.float32, -scale, scale)
        b = jax.random.uniform(keys[2 * i + 1], (1, d_out), jnp.float32, -scale, scale)
        params += [w, b]
    return tuple(params)


def _reference_bf16(xf, params):
    """Same precision path as the kernel: bf16 MXU operands, f32 accumulation."""
    w1, b1, w2, b2, w3, b3 = params

    def mm(a, w):
        return jnp.dot(a.astype(jnp.bfloat16), w.astype(jnp.bfloat16),
                       preferred_element_type=jnp.float32)

    h = jnp.maximum(mm(xf, w1) + b1, 0.0)
    h = jnp.maximum(mm(h, w2) + b2, 0.0)
    return mm(h, w3) + b3


def _reference_f32(xf, params):
    """Pure-f32 math (PyTorch forward semantics)."""
    w1, b1, w2, b2, w3, b3 = params
    h = jnp.maximum(xf @ w1 + b1, 0.0)
    h = jnp.maximum(h @ w2 + b2, 0.0)
    return h @ w3 + b3


if __name__ == "__main__":
    input_size = 4          # board side -> flattened feature dim = 16
    batch = 2

    key = jax.random.PRNGKey(0)
    kx, kp, kx2 = jax.random.split(key, 3)
    x = jax.random.normal(kx, (batch, input_size, input_size), jnp.float32)
    params = init_params(input_size, kp)
    prepared, n_out = prepare_params(params)

    # --- Tiny inference batch: single 16-row tile, grid=(1,) ---
    out = dqn_forward(x, prepared, n_out)
    jax.block_until_ready(out)
    assert out.shape == (batch, n_out)

    xf = x.reshape(batch, -1)
    ref_bf16 = _reference_bf16(xf, params)
    assert jnp.allclose(out, ref_bf16, atol=1e-3, rtol=1e-3), \
        "mismatch vs bf16-path reference (small batch)"
    ref_f32 = _reference_f32(xf, params)
    assert jnp.allclose(out, ref_f32, atol=5e-2, rtol=5e-2), \
        "mismatch vs f32 reference (small batch)"

    # --- Training-sized batch: 256-row tiles, grid=(2,), megacore-splittable ---
    batch2 = 384
    x2 = jax.random.normal(kx2, (batch2, input_size, input_size), jnp.float32)
    out2 = dqn_forward(x2, prepared, n_out)
    jax.block_until_ready(out2)
    assert out2.shape == (batch2, n_out)

    xf2 = x2.reshape(batch2, -1)
    ref2_bf16 = _reference_bf16(xf2, params)
    assert jnp.allclose(out2, ref2_bf16, atol=1e-3, rtol=1e-3), \
        "mismatch vs bf16-path reference (multi-tile batch)"
    ref2_f32 = _reference_f32(xf2, params)
    assert jnp.allclose(out2, ref2_f32, atol=5e-2, rtol=5e-2), \
        "mismatch vs f32 reference (multi-tile batch)"

    print("KERNEL_OK")
</pallas_src>

<mosaic_0001>
module attributes {stable_mosaic.version = 11 : i64} {
  func.func @dqn_mlp_kernel(%arg0: i32, %arg1: memref<16x16xbf16, #tpu.memory_space<vmem>>, %arg2: memref<16x256xbf16, #tpu.memory_space<vmem>>, %arg3: memref<1x256xf32, #tpu.memory_space<vmem>>, %arg4: memref<256x128xbf16, #tpu.memory_space<vmem>>, %arg5: memref<1x128xf32, #tpu.memory_space<vmem>>, %arg6: memref<128x128xbf16, #tpu.memory_space<vmem>>, %arg7: memref<1x128xf32, #tpu.memory_space<vmem>>, %arg8: memref<16x128xf32, #tpu.memory_space<vmem>>) attributes {dimension_semantics = [#tpu.dimension_semantics<parallel>], iteration_bounds = array<i64: 1>, scalar_prefetch = 0 : i64, scratch_operands = 0 : i64, tpu.core_type = #tpu.core_type<tc>, window_params = [{transform_indices = @transform_0, window_bounds = array<i64: 16, 16>}, {pipeline_mode = #tpu.pipeline_mode<synchronous>, transform_indices = @transform_1, window_bounds = array<i64: 16, 256>}, {pipeline_mode = #tpu.pipeline_mode<synchronous>, transform_indices = @transform_2, window_bounds = array<i64: 1, 256>}, {pipeline_mode = #tpu.pipeline_mode<synchronous>, transform_indices = @transform_3, window_bounds = array<i64: 256, 128>}, {pipeline_mode = #tpu.pipeline_mode<synchronous>, transform_indices = @transform_4, window_bounds = array<i64: 1, 128>}, {pipeline_mode = #tpu.pipeline_mode<synchronous>, transform_indices = @transform_5, window_bounds = array<i64: 128, 128>}, {pipeline_mode = #tpu.pipeline_mode<synchronous>, transform_indices = @transform_6, window_bounds = array<i64: 1, 128>}, {transform_indices = @transform_7, window_bounds = array<i64: 16, 128>}]} {
    %c0 = arith.constant 0 : index
    %c0_0 = arith.constant 0 : index
    %0 = vector.load %arg1[%c0, %c0_0] : memref<16x16xbf16, #tpu.memory_space<vmem>>, vector<16x16xbf16>
    %c0_1 = arith.constant 0 : index
    %c0_2 = arith.constant 0 : index
    %1 = vector.load %arg2[%c0_1, %c0_2] : memref<16x256xbf16, #tpu.memory_space<vmem>>, vector<16x256xbf16>
    %cst = arith.constant dense<0.000000e+00> : vector<16x256xf32>
    %2 = tpu.matmul %0, %1, %cst {dimension_numbers = #tpu.dot_dimension_numbers<[1], [0], [0], [1], [0, 0, 1, 1], [], []>} : vector<16x16xbf16>, vector<16x256xbf16>, vector<16x256xf32> -> vector<16x256xf32>
    %c0_3 = arith.constant 0 : index
    %c0_4 = arith.constant 0 : index
    %3 = vector.load %arg3[%c0_3, %c0_4] : memref<1x256xf32, #tpu.memory_space<vmem>>, vector<1x256xf32>
    %4 = vector.broadcast %3 : vector<1x256xf32> to vector<16x256xf32>
    %5 = arith.addf %2, %4 : vector<16x256xf32>
    %cst_5 = arith.constant 0.000000e+00 : f32
    %6 = vector.broadcast %cst_5 : f32 to vector<16x256xf32>
    %7 = arith.maximumf %5, %6 : vector<16x256xf32>
    %8 = arith.truncf %7 : vector<16x256xf32> to vector<16x256xbf16>
    %c0_6 = arith.constant 0 : index
    %c0_7 = arith.constant 0 : index
    %9 = vector.load %arg4[%c0_6, %c0_7] : memref<256x128xbf16, #tpu.memory_space<vmem>>, vector<256x128xbf16>
    %cst_8 = arith.constant dense<0.000000e+00> : vector<16x128xf32>
    %10 = tpu.matmul %8, %9, %cst_8 {dimension_numbers = #tpu.dot_dimension_numbers<[1], [0], [0], [1], [0, 0, 1, 1], [], []>} : vector<16x256xbf16>, vector<256x128xbf16>, vector<16x128xf32> -> vector<16x128xf32>
    %c0_9 = arith.constant 0 : index
    %c0_10 = arith.constant 0 : index
    %11 = vector.load %arg5[%c0_9, %c0_10] : memref<1x128xf32, #tpu.memory_space<vmem>>, vector<1x128xf32>
    %12 = vector.broadcast %11 : vector<1x128xf32> to vector<16x128xf32>
    %13 = arith.addf %10, %12 : vector<16x128xf32>
    %cst_11 = arith.constant 0.000000e+00 : f32
    %14 = vector.broadcast %cst_11 : f32 to vector<16x128xf32>
    %15 = arith.maximumf %13, %14 : vector<16x128xf32>
    %16 = arith.truncf %15 : vector<16x128xf32> to vector<16x128xbf16>
    %c0_12 = arith.constant 0 : index
    %c0_13 = arith.constant 0 : index
    %17 = vector.load %arg6[%c0_12, %c0_13] : memref<128x128xbf16, #tpu.memory_space<vmem>>, vector<128x128xbf16>
    %cst_14 = arith.constant dense<0.000000e+00> : vector<16x128xf32>
    %18 = tpu.matmul %16, %17, %cst_14 {dimension_numbers = #tpu.dot_dimension_numbers<[1], [0], [0], [1], [0, 0, 1, 1], [], []>} : vector<16x128xbf16>, vector<128x128xbf16>, vector<16x128xf32> -> vector<16x128xf32>
    %c0_15 = arith.constant 0 : index
    %c0_16 = arith.constant 0 : index
    %19 = vector.load %arg7[%c0_15, %c0_16] : memref<1x128xf32, #tpu.memory_space<vmem>>, vector<1x128xf32>
    %20 = vector.broadcast %19 : vector<1x128xf32> to vector<16x128xf32>
    %21 = arith.addf %18, %20 : vector<16x128xf32>
    %c0_17 = arith.constant 0 : index
    %c0_18 = arith.constant 0 : index
    %22 = vector.load %arg8[%c0_17, %c0_18] : memref<16x128xf32, #tpu.memory_space<vmem>>, vector<16x128xf32>
    tpu.vector_store %arg8[%c0_17, %c0_18], %21 {strides = array<i32>} : memref<16x128xf32, #tpu.memory_space<vmem>>, vector<16x128xf32>,
    return
  }
  func.func @transform_0(%arg0: i32) -> (i32, i32) {
    %c0_i32 = arith.constant 0 : i32
    %c0_i32_0 = arith.constant 0 : i32
    return %arg0, %c0_i32 : i32, i32
  }
  func.func @transform_1(%arg0: i32) -> (i32, i32) {
    %c0_i32 = arith.constant 0 : i32
    %c0_i32_0 = arith.constant 0 : i32
    %c0_i32_1 = arith.constant 0 : i32
    return %c0_i32, %c0_i32_0 : i32, i32
  }
  func.func @transform_2(%arg0: i32) -> (i32, i32) {
    %c0_i32 = arith.constant 0 : i32
    %c0_i32_0 = arith.constant 0 : i32
    %c0_i32_1 = arith.constant 0 : i32
    return %c0_i32, %c0_i32_0 : i32, i32
  }
  func.func @transform_3(%arg0: i32) -> (i32, i32) {
    %c0_i32 = arith.constant 0 : i32
    %c0_i32_0 = arith.constant 0 : i32
    %c0_i32_1 = arith.constant 0 : i32
    return %c0_i32, %c0_i32_0 : i32, i32
  }
  func.func @transform_4(%arg0: i32) -> (i32, i32) {
    %c0_i32 = arith.constant 0 : i32
    %c0_i32_0 = arith.constant 0 : i32
    %c0_i32_1 = arith.constant 0 : i32
    return %c0_i32, %c0_i32_0 : i32, i32
  }
  func.func @transform_5(%arg0: i32) -> (i32, i32) {
    %c0_i32 = arith.constant 0 : i32
    %c0_i32_0 = arith.constant 0 : i32
    %c0_i32_1 = arith.constant 0 : i32
    return %c0_i32, %c0_i32_0 : i32, i32
  }
  func.func @transform_6(%arg0: i32) -> (i32, i32) {
    %c0_i32 = arith.constant 0 : i32
    %c0_i32_0 = arith.constant 0 : i32
    %c0_i32_1 = arith.constant 0 : i32
    return %c0_i32, %c0_i32_0 : i32, i32
  }
  func.func @transform_7(%arg0: i32) -> (i32, i32) {
    %c0_i32 = arith.constant 0 : i32
    %c0_i32_0 = arith.constant 0 : i32
    return %arg0, %c0_i32 : i32, i32
  }
}

</mosaic_0001>

<llo_original>
// kernel: _dqn_forward_impl.1
$region0: #{_dqn_forward_impl.1}
  #allocation0 [shape = 'u32[]', space=smem, size = 0x4, offset = 0x4, fixed_abs, tag = 'smem constant byte address 0x4 - core index']
  #allocation1 [shape = 'u32[144,128]{1,0:T(1,128)}', space=vmem, size = 0x12000, scoped, tag = 'internal scratch']
  %s0 = inlined_call_operand.vmem [shape: bf16[16,16], index: 0, kind: input, shape index: {}]
  %s1 = inlined_call_operand.vmem [shape: bf16[16,256], index: 1, kind: input, shape index: {}]
  %s2 = inlined_call_operand.vmem [shape: f32[1,256], index: 2, kind: input, shape index: {}]
  %s3 = inlined_call_operand.hbm [shape: bf16[256,128], index: 3, kind: input, shape index: {}]
  %s4 = inlined_call_operand.vmem [shape: f32[1,128], index: 4, kind: input, shape index: {}]
  %s5 = inlined_call_operand.hbm [shape: bf16[128,128], index: 5, kind: input, shape index: {}]
  %s6 = inlined_call_operand.vmem [shape: f32[1,128], index: 6, kind: input, shape index: {}]
  %s7 = inlined_call_operand.vmem [shape: f32[16,128], index: 7, kind: output, shape index: {}]
  %s8 = sld [smem:[#allocation0]]
  $region46: #{_dqn_forward_impl.1} parent=0
    _
  %s10 = ssub.s32 1, %s8
  %s11 = scalar_select 0, %s10, %s8
  $region1: #{_dqn_forward_impl.1} parent=0
    #allocation2 [shape = 'u8[65536]{0}', space=vmem, size = 0x10000, scoped, tag = 'input window, operand 3, single buffered']
    #allocation3 [shape = 's32[1]{0}', space=sflag, size = 0x4, scoped, tag = 'scoped memory for _dqn_forward_impl.1']
    #allocation4 [shape = 'u8[32768]{0}', space=vmem, size = 0x8000, scoped, tag = 'input window, operand 5, single buffered']
    #allocation5 [shape = 's32[1]{0}', space=sflag, size = 0x4, scoped, tag = 'scoped memory for _dqn_forward_impl.1']
    %12 = vsyncpa [#allocation3], 0
    %13 = vsyncpa [#allocation5], 0
    // Predicated region
    $region2: #{_dqn_forward_impl.1} parent=1 // pred_check
      _
    $region3: #{_dqn_forward_impl.1} parent=1 // pred_check_branch
      %15 = sbr.rel (0) target = $region5
    $region4: #{_dqn_forward_impl.1} parent=1 // pred_region
      _
    $region5: #{_dqn_forward_impl.1} parent=1 // pred_fallthru
      _
    // Predicated region
    $region6: #{_dqn_forward_impl.1} parent=1 // pred_check
      _
    $region7: #{_dqn_forward_impl.1} parent=1 // pred_check_branch
      %17 = sbr.rel (0) target = $region9
    $region8: #{_dqn_forward_impl.1} parent=1 // pred_region
      _
    $region9: #{_dqn_forward_impl.1} parent=1 // pred_fallthru
      _
    // Predicated region
    $region10: #{_dqn_forward_impl.1} parent=1 // pred_check
      _
    $region11: #{_dqn_forward_impl.1} parent=1 // pred_check_branch
      %19 = sbr.rel (0) target = $region13
    $region12: #{_dqn_forward_impl.1} parent=1 // pred_region
      _
    $region13: #{_dqn_forward_impl.1} parent=1 // pred_fallthru
      _
    // Predicated region
    $region14: #{_dqn_forward_impl.1} parent=1 // pred_check
      _
    $region15: #{_dqn_forward_impl.1} parent=1 // pred_check_branch
      %21 = sbr.rel (0) target = $region17
    $region16: #{_dqn_forward_impl.1} parent=1 // pred_region
      %s23 = ssub.s32 2048, 2048
      %24 = vsyncadd [#allocation3], %s23
      %s25 = sshll.u32 [#allocation2], 4
      %s26 = int_to_ptr.vmem [resolvable:$true] %s25
      %31 = dma.hbm_to_vmem [thread:$0]  %s3, 2048, %s26, [#allocation3], 64, 64, 4
    $region17: #{_dqn_forward_impl.1} parent=1 // pred_fallthru
      _
    // Predicated region
    $region18: #{_dqn_forward_impl.1} parent=1 // pred_check
      _
    $region19: #{_dqn_forward_impl.1} parent=1 // pred_check_branch
      %33 = sbr.rel (0) target = $region21
    $region20: #{_dqn_forward_impl.1} parent=1 // pred_region
      _
    $region21: #{_dqn_forward_impl.1} parent=1 // pred_fallthru
      _
    // Predicated region
    $region22: #{_dqn_forward_impl.1} parent=1 // pred_check
      _
    $region23: #{_dqn_forward_impl.1} parent=1 // pred_check_branch
      %35 = sbr.rel (0) target = $region25
    $region24: #{_dqn_forward_impl.1} parent=1 // pred_region
      %s37 = ssub.s32 1024, 1024
      %38 = vsyncadd [#allocation5], %s37
      %s39 = sshll.u32 [#allocation4], 4
      %s40 = int_to_ptr.vmem [resolvable:$true] %s39
      %45 = dma.hbm_to_vmem [thread:$0]  %s5, 1024, %s40, [#allocation5], 64, 64, 4
    $region25: #{_dqn_forward_impl.1} parent=1 // pred_fallthru
      _
    // Predicated region
    $region26: #{_dqn_forward_impl.1} parent=1 // pred_check
      _
    $region27: #{_dqn_forward_impl.1} parent=1 // pred_check_branch
      %47 = sbr.rel (0) target = $region29
    $region28: #{_dqn_forward_impl.1} parent=1 // pred_region
      _
    $region29: #{_dqn_forward_impl.1} parent=1 // pred_fallthru
      _
    // Predicated region
    $region30: #{_dqn_forward_impl.1} parent=1 // pred_check
      _
    $region31: #{_dqn_forward_impl.1} parent=1 // pred_check_branch
      %49 = sbr.rel (0) target = $region33
    $region32: #{_dqn_forward_impl.1} parent=1 // pred_region
      %50 = dma.done [#allocation3], 2048
    $region33: #{_dqn_forward_impl.1} parent=1 // pred_fallthru
      _
    // Predicated region
    $region34: #{_dqn_forward_impl.1} parent=1 // pred_check
      _
    $region35: #{_dqn_forward_impl.1} parent=1 // pred_check_branch
      %52 = sbr.rel (0) target = $region37
    $region36: #{_dqn_forward_impl.1} parent=1 // pred_region
      %53 = dma.done [#allocation5], 1024
    $region37: #{_dqn_forward_impl.1} parent=1 // pred_fallthru
      _
    %v55 = vld [vmem:[%s0] sm:$0xf]
    %v56 = vld [vmem:[%s0 + $0x4] sm:$0xf]
    %v57 = vld [vmem:[%s1] sm:$0xff]
    %v58 = vld [vmem:[%s1 + $0x8] sm:$0xff]
    %v59 = vld [vmem:[%s2] sm:$0x3]
    %v61 = vlaneseq
    %v62 = vshrl.u32 %v61, 7
    %v63 = vsub.s32 0, %v62
    %v64 = vrot.slane %v59, %v63
    %v65 = vlaneseq
    %v66 = vshrl.u32 %v65, 7
    %v67 = vsub.s32 1, %v66
    %v68 = vrot.slane %v59, %v67
    %v73 = vunpack.c.l.b16 %v55
    %v74 = vunpack.c.l.b16 %v56
    %v75 = vpack.c.b16 %v74, %v73
    %v78 = vunpack.c.l.b16 %v57
    %v79 = vunpack.c.h.b16 %v57
    %v80 = vunpack.c.l.b16 %v58
    %v81 = vunpack.c.h.b16 %v58
    %v82 = vpack.c.b16 %v80, %v78
    %v83 = vpack.c.b16 %v81, %v79
    %vm86 = vcmask 130048
    %v88 = vsel %vm86, %v75, 0
    %90 = vmatprep.subr.bf16.mxu0 %v83
    %91 = vmatpush1.bf16.msra.mxu0 %v82
    %92 = vmatprep.subr.bf16.mxu0 0
    %93 = vmatpush1.bf16.msra.mxu0 0
    %94 = vmatprep.subr.bf16.mxu0 0
    %95 = vmatpush1.bf16.msra.mxu0 0
    %96 = vmatprep.subr.bf16.mxu0 0
    %97 = vmatpush1.bf16.msra.mxu0 0
    %98 = vmatprep.subr.bf16.mxu0 0
    %99 = vmatpush1.bf16.msra.mxu0 0
    %100 = vmatprep.subr.bf16.mxu0 0
    %101 = vmatpush1.bf16.msra.mxu0 0
    %102 = vmatprep.subr.bf16.mxu0 0
    %103 = vmatpush1.bf16.msra.mxu0 0
    %104 = vmatprep.subr.bf16.mxu0 0
    %105 = vmatpush1.bf16.msra.mxu0 0
    %106 = vmatprep.subr.bf16.mxu0 0
    %107 = vmatpush1.bf16.msra.mxu0 0
    %108 = vmatprep.subr.bf16.mxu0 0
    %109 = vmatpush1.bf16.msra.mxu0 0
    %110 = vmatprep.subr.bf16.mxu0 0
    %111 = vmatpush1.bf16.msra.mxu0 0
    %112 = vmatprep.subr.bf16.mxu0 0
    %113 = vmatpush1.bf16.msra.mxu0 0
    %114 = vmatprep.subr.bf16.mxu0 0
    %115 = vmatpush1.bf16.msra.mxu0 0
    %116 = vmatprep.subr.bf16.mxu0 0
    %117 = vmatpush1.bf16.msra.mxu0 0
    %118 = vmatprep.subr.bf16.mxu0 0
    %119 = vmatpush1.bf16.msra.mxu0 0
    %120 = vmatprep.subr.bf16.mxu0 0
    %121 = vmatpush1.bf16.msra.mxu0 0
    %122 = vmatprep.mubr.bf16.mxu0 0
    %123 = vmatmul.mubr.bf16.gmra.mrb[0].mxu0 %v88
    %v124 = vpop.f32.mrb[0].mxu0
    %v125 = vadd.f32 %v64, %v124
    %v126 = vpop.f32.mrb[0].mxu0
    %v127 = vadd.f32 %v68, %v126
    %v128 = vpop.f32.mrb[0].mxu0
    %v129 = vadd.f32 %v64, %v128
    %v130 = vpop.f32.mrb[0].mxu0
    %v131 = vadd.f32 %v68, %v130
    %132 = vdwg.mxu0
    %v133 = vmax.f32 %v125, 0.0
    %v134 = vmax.f32 %v127, 0.0
    %v135 = vmax.f32 %v129, 0.0
    %v136 = vmax.f32 %v131, 0.0
    %v137 = vpack.c.bf16 %v135, %v133
    %v138 = vpack.c.bf16 %v136, %v134
    %v139 = vld [vmem:[#allocation2] sm:$0xf]
    %v140 = vld [vmem:[#allocation2 + $0x4] sm:$0xf]
    %v141 = vld [vmem:[#allocation2 + $0x8] sm:$0xf]
    %v142 = vld [vmem:[#allocation2 + $0xc] sm:$0xf]
    %v143 = vld [vmem:[#allocation2 + $0x10] sm:$0xf]
    %v144 = vld [vmem:[#allocation2 + $0x14] sm:$0xf]
    %v145 = vld [vmem:[#allocation2 + $0x18] sm:$0xf]
    %v146 = vld [vmem:[#allocation2 + $0x1c] sm:$0xf]
    %v147 = vld [vmem:[#allocation2 + $0x20] sm:$0xf]
    %v148 = vld [vmem:[#allocation2 + $0x24] sm:$0xf]
    %v149 = vld [vmem:[#allocation2 + $0x28] sm:$0xf]
    %v150 = vld [vmem:[#allocation2 + $0x2c] sm:$0xf]
    %v151 = vld [vmem:[#allocation2 + $0x30] sm:$0xf]
    %v152 = vld [vmem:[#allocation2 + $0x34] sm:$0xf]
    %v153 = vld [vmem:[#allocation2 + $0x38] sm:$0xf]
    %v154 = vld [vmem:[#allocation2 + $0x3c] sm:$0xf]
    %v155 = vld [vmem:[#allocation2 + $0x40] sm:$0xf]
    %v156 = vld [vmem:[#allocation2 + $0x44] sm:$0xf]
    %v157 = vld [vmem:[#allocation2 + $0x48] sm:$0xf]
    %v158 = vld [vmem:[#allocation2 + $0x4c] sm:$0xf]
    %v159 = vld [vmem:[#allocation2 + $0x50] sm:$0xf]
    %v160 = vld [vmem:[#allocation2 + $0x54] sm:$0xf]
    %v161 = vld [vmem:[#allocation2 + $0x58] sm:$0xf]
    %v162 = vld [vmem:[#allocation2 + $0x5c] sm:$0xf]
    %v163 = vld [vmem:[#allocation2 + $0x60] sm:$0xf]
    %v164 = vld [vmem:[#allocation2 + $0x64] sm:$0xf]
    %v165 = vld [vmem:[#allocation2 + $0x68] sm:$0xf]
    %v166 = vld [vmem:[#allocation2 + $0x6c] sm:$0xf]
    %v167 = vld [vmem:[#allocation2 + $0x70] sm:$0xf]
    %v168 = vld [vmem:[#allocation2 + $0x74] sm:$0xf]
    %v169 = vld [vmem:[#allocation2 + $0x78] sm:$0xf]
    %v170 = vld [vmem:[#allocation2 + $0x7c] sm:$0xf]
    %v171 = vld [vmem:[%s4] sm:$0x1]
    %v173 = vlaneseq
    %v174 = vshrl.u32 %v173, 7
    %v175 = vsub.s32 0, %v174
    %v176 = vrot.slane %v171, %v175
    %v210 = vunpack.c.l.b16 %v139
    %v211 = vunpack.c.l.b16 %v140
    %v212 = vunpack.c.l.b16 %v141
    %v213 = vunpack.c.l.b16 %v142
    %v214 = vunpack.c.l.b16 %v143
    %v215 = vunpack.c.l.b16 %v144
    %v216 = vunpack.c.l.b16 %v145
    %v217 = vunpack.c.l.b16 %v146
    %v218 = vunpack.c.l.b16 %v147
    %v219 = vunpack.c.l.b16 %v148
    %v220 = vunpack.c.l.b16 %v149
    %v221 = vunpack.c.l.b16 %v150
    %v222 = vunpack.c.l.b16 %v151
    %v223 = vunpack.c.l.b16 %v152
    %v224 = vunpack.c.l.b16 %v153
    %v225 = vunpack.c.l.b16 %v154
    %v226 = vunpack.c.l.b16 %v155
    %v227 = vunpack.c.l.b16 %v156
    %v228 = vunpack.c.l.b16 %v157
    %v229 = vunpack.c.l.b16 %v158
    %v230 = vunpack.c.l.b16 %v159
    %v231 = vunpack.c.l.b16 %v160
    %v232 = vunpack.c.l.b16 %v161
    %v233 = vunpack.c.l.b16 %v162
    %v234 = vunpack.c.l.b16 %v163
    %v235 = vunpack.c.l.b16 %v164
    %v236 = vunpack.c.l.b16 %v165
    %v237 = vunpack.c.l.b16 %v166
    %v238 = vunpack.c.l.b16 %v167
    %v239 = vunpack.c.l.b16 %v168
    %v240 = vunpack.c.l.b16 %v169
    %v241 = vunpack.c.l.b16 %v170
    %v242 = vpack.c.b16 %v211, %v210
    %v243 = vpack.c.b16 %v213, %v212
    %v244 = vpack.c.b16 %v215, %v214
    %v245 = vpack.c.b16 %v217, %v216
    %v246 = vpack.c.b16 %v219, %v218
    %v247 = vpack.c.b16 %v221, %v220
    %v248 = vpack.c.b16 %v223, %v222
    %v249 = vpack.c.b16 %v225, %v224
    %v250 = vpack.c.b16 %v227, %v226
    %v251 = vpack.c.b16 %v229, %v228
    %v252 = vpack.c.b16 %v231, %v230
    %v253 = vpack.c.b16 %v233, %v232
    %v254 = vpack.c.b16 %v235, %v234
    %v255 = vpack.c.b16 %v237, %v236
    %v256 = vpack.c.b16 %v239, %v238
    %v257 = vpack.c.b16 %v241, %v240
    %274 = vmatprep.subr.bf16.mxu0 0
    %275 = vmatpush1.bf16.msra.mxu0 %v242
    %276 = vmatprep.subr.bf16.mxu0 0
    %277 = vmatpush1.bf16.msra.mxu0 %v243
    %278 = vmatprep.subr.bf16.mxu0 0
    %279 = vmatpush1.bf16.msra.mxu0 %v244
    %280 = vmatprep.subr.bf16.mxu0 0
    %281 = vmatpush1.bf16.msra.mxu0 %v245
    %282 = vmatprep.subr.bf16.mxu0 0
    %283 = vmatpush1.bf16.msra.mxu0 %v246
    %284 = vmatprep.subr.bf16.mxu0 0
    %285 = vmatpush1.bf16.msra.mxu0 %v247
    %286 = vmatprep.subr.bf16.mxu0 0
    %287 = vmatpush1.bf16.msra.mxu0 %v248
    %288 = vmatprep.subr.bf16.mxu0 0
    %289 = vmatpush1.bf16.msra.mxu0 %v249
    %290 = vmatprep.subr.bf16.mxu0 0
    %291 = vmatpush1.bf16.msra.mxu0 %v250
    %292 = vmatprep.subr.bf16.mxu0 0
    %293 = vmatpush1.bf16.msra.mxu0 %v251
    %294 = vmatprep.subr.bf16.mxu0 0
    %295 = vmatpush1.bf16.msra.mxu0 %v252
    %296 = vmatprep.subr.bf16.mxu0 0
    %297 = vmatpush1.bf16.msra.mxu0 %v253
    %298 = vmatprep.subr.bf16.mxu0 0
    %299 = vmatpush1.bf16.msra.mxu0 %v254
    %300 = vmatprep.subr.bf16.mxu0 0
    %301 = vmatpush1.bf16.msra.mxu0 %v255
    %302 = vmatprep.subr.bf16.mxu0 0
    %303 = vmatpush1.bf16.msra.mxu0 %v256
    %304 = vmatprep.subr.bf16.mxu0 0
    %305 = vmatpush1.bf16.msra.mxu0 %v257
    %306 = vmatprep.mubr.bf16.mxu0 %v138
    %307 = vmatmul.mubr.bf16.gmra.mrb[0].mxu0 %v137
    %v308 = vpop.f32.mrb[0].mxu0
    %v309 = vadd.f32 %v176, %v308
    %v310 = vpop.f32.mrb[0].mxu0
    %v311 = vpop.f32.mrb[0].mxu0
    %v312 = vadd.f32 %v176, %v311
    %v313 = vpop.f32.mrb[0].mxu0
    %314 = vdwg.mxu0
    %v315 = vmax.f32 %v309, 0.0
    %v316 = vmax.f32 %v312, 0.0
    %v317 = vpack.c.bf16 %v316, %v315
    %v318 = vld [vmem:[#allocation4] sm:$0xf]
    %v319 = vld [vmem:[#allocation4 + $0x4] sm:$0xf]
    %v320 = vld [vmem:[#allocation4 + $0x8] sm:$0xf]
    %v321 = vld [vmem:[#allocation4 + $0xc] sm:$0xf]
    %v322 = vld [vmem:[#allocation4 + $0x10] sm:$0xf]
    %v323 = vld [vmem:[#allocation4 + $0x14] sm:$0xf]
    %v324 = vld [vmem:[#allocation4 + $0x18] sm:$0xf]
    %v325 = vld [vmem:[#allocation4 + $0x1c] sm:$0xf]
    %v326 = vld [vmem:[#allocation4 + $0x20] sm:$0xf]
    %v327 = vld [vmem:[#allocation4 + $0x24] sm:$0xf]
    %v328 = vld [vmem:[#allocation4 + $0x28] sm:$0xf]
    %v329 = vld [vmem:[#allocation4 + $0x2c] sm:$0xf]
    %v330 = vld [vmem:[#allocation4 + $0x30] sm:$0xf]
    %v331 = vld [vmem:[#allocation4 + $0x34] sm:$0xf]
    %v332 = vld [vmem:[#allocation4 + $0x38] sm:$0xf]
    %v333 = vld [vmem:[#allocation4 + $0x3c] sm:$0xf]
    %v334 = vld [vmem:[%s6] sm:$0x1]
    %v336 = vlaneseq
    %v337 = vshrl.u32 %v336, 7
    %v338 = vsub.s32 0, %v337
    %v339 = vrot.slane %v334, %v338
    %v357 = vunpack.c.l.b16 %v318
    %v358 = vunpack.c.l.b16 %v319
    %v359 = vunpack.c.l.b16 %v320
    %v360 = vunpack.c.l.b16 %v321
    %v361 = vunpack.c.l.b16 %v322
    %v362 = vunpack.c.l.b16 %v323
    %v363 = vunpack.c.l.b16 %v324
    %v364 = vunpack.c.l.b16 %v325
    %v365 = vunpack.c.l.b16 %v326
    %v366 = vunpack.c.l.b16 %v327
    %v367 = vunpack.c.l.b16 %v328
    %v368 = vunpack.c.l.b16 %v329
    %v369 = vunpack.c.l.b16 %v330
    %v370 = vunpack.c.l.b16 %v331
    %v371 = vunpack.c.l.b16 %v332
    %v372 = vunpack.c.l.b16 %v333
    %v373 = vpack.c.b16 %v358, %v357
    %v374 = vpack.c.b16 %v360, %v359
    %v375 = vpack.c.b16 %v362, %v361
    %v376 = vpack.c.b16 %v364, %v363
    %v377 = vpack.c.b16 %v366, %v365
    %v378 = vpack.c.b16 %v368, %v367
    %v379 = vpack.c.b16 %v370, %v369
    %v380 = vpack.c.b16 %v372, %v371
    %389 = vmatprep.subr.bf16.mxu0 0
    %390 = vmatpush1.bf16.msra.mxu0 %v373
    %391 = vmatprep.subr.bf16.mxu0 0
    %392 = vmatpush1.bf16.msra.mxu0 %v374
    %393 = vmatprep.subr.bf16.mxu0 0
    %394 = vmatpush1.bf16.msra.mxu0 %v375
    %395 = vmatprep.subr.bf16.mxu0 0
    %396 = vmatpush1.bf16.msra.mxu0 %v376
    %397 = vmatprep.subr.bf16.mxu0 0
    %398 = vmatpush1.bf16.msra.mxu0 %v377
    %399 = vmatprep.subr.bf16.mxu0 0
    %400 = vmatpush1.bf16.msra.mxu0 %v378
    %401 = vmatprep.subr.bf16.mxu0 0
    %402 = vmatpush1.bf16.msra.mxu0 %v379
    %403 = vmatprep.subr.bf16.mxu0 0
    %404 = vmatpush1.bf16.msra.mxu0 %v380
    %405 = vmatprep.subr.bf16.mxu0 0
    %406 = vmatpush1.bf16.msra.mxu0 0
    %407 = vmatprep.subr.bf16.mxu0 0
    %408 = vmatpush1.bf16.msra.mxu0 0
    %409 = vmatprep.subr.bf16.mxu0 0
    %410 = vmatpush1.bf16.msra.mxu0 0
    %411 = vmatprep.subr.bf16.mxu0 0
    %412 = vmatpush1.bf16.msra.mxu0 0
    %413 = vmatprep.subr.bf16.mxu0 0
    %414 = vmatpush1.bf16.msra.mxu0 0
    %415 = vmatprep.subr.bf16.mxu0 0
    %416 = vmatpush1.bf16.msra.mxu0 0
    %417 = vmatprep.subr.bf16.mxu0 0
    %418 = vmatpush1.bf16.msra.mxu0 0
    %419 = vmatprep.subr.bf16.mxu0 0
    %420 = vmatpush1.bf16.msra.mxu0 0
    %421 = vmatprep.mubr.bf16.mxu0 0
    %422 = vmatmul.mubr.bf16.gmra.mrb[0].mxu0 %v317
    %v423 = vpop.f32.mrb[0].mxu0
    %v424 = vadd.f32 %v339, %v423
    %v425 = vpop.f32.mrb[0].mxu0
    %v426 = vpop.f32.mrb[0].mxu0
    %v427 = vadd.f32 %v339, %v426
    %v428 = vpop.f32.mrb[0].mxu0
    %429 = vdwg.mxu0
    %430 = vst [vmem:[%s7] sm:$0xff] %v424
    %431 = vst [vmem:[%s7 + $0x8] sm:$0xff] %v427
    // Predicated region
    $region38: #{_dqn_forward_impl.1} parent=1 // pred_check
      _
    $region39: #{_dqn_forward_impl.1} parent=1 // pred_check_branch
      %433 = sbr.rel (0) target = $region41
    $region40: #{_dqn_forward_impl.1} parent=1 // pred_region
      _
    $region41: #{_dqn_forward_impl.1} parent=1 // pred_fallthru
      _
    // Predicated region
    $region42: #{_dqn_forward_impl.1} parent=1 // pred_check
      _
    $region43: #{_dqn_forward_impl.1} parent=1 // pred_check_branch
      %435 = sbr.rel (0) target = $region45
    $region44: #{_dqn_forward_impl.1} parent=1 // pred_region
      _
    $region45: #{_dqn_forward_impl.1} parent=1 // pred_fallthru
      _
    %436 = vsyncpa [#allocation3], 1
    %437 = vsyncpa [#allocation5], 1

</llo_original>
